<compile_context>
chip_gen: v7x
topology: tpu7x:2x2x1
jax: 0.10.0
libtpu: 0.0.40
codegen_flags: <defaults>
</compile_context>

<pallas_src>
import jax
import jax.numpy as jnp
from jax import lax
from jax.experimental import pallas as pl
from jax.experimental.pallas import tpu as pltpu


def _linear_kernel(x_ref, w_ref, b_ref, o_ref):
    # Blocks: x (tm, D), w (tn, D), b (1, tn), o (tm, tn).
    # Contract x's last dim with w's last dim (no transpose needed).
    acc = lax.dot_general(
        x_ref[...],
        w_ref[...],
        dimension_numbers=(((1,), (1,)), ((), ())),
        preferred_element_type=jnp.float32,
    )
    o_ref[...] = (acc + b_ref[...].astype(jnp.float32)).astype(o_ref.dtype)


def linear_classifier_pallas(x, w, b, *, tile_m=256, tile_n=512):
    """y = x @ w.T + b  (nn.Linear), tiled over (B, C) on the MXU.

    x: (B, D)   activations (any float dtype; bf16 recommended)
    w: (C, D)   nn.Linear weight, NOT transposed
    b: (1, C)   bias (f32)
    returns (B, C) float32
    """
    B, D = x.shape
    C = w.shape[0]

    # Tile sizes: full-array blocks for small problems (satisfies the
    # (8,128) rule via the "equals full dim" escape hatch), otherwise
    # MXU/VMEM-friendly multiples of (8, 128).
    tm = B if B <= tile_m else tile_m          # tile_m is a multiple of 8
    tn = C if C <= tile_n else tile_n          # tile_n is a multiple of 128
    grid = (pl.cdiv(B, tm), pl.cdiv(C, tn))

    itemsize = lambda a: jnp.dtype(a.dtype).itemsize
    cost = pl.CostEstimate(
        flops=2 * B * D * C,
        transcendentals=0,
        bytes_accessed=(B * D * itemsize(x)
                        + C * D * itemsize(w)
                        + C * itemsize(b)
                        + B * C * 4),
    )

    return pl.pallas_call(
        _linear_kernel,
        out_shape=jax.ShapeDtypeStruct((B, C), jnp.float32),
        grid_spec=pltpu.PrefetchScalarGridSpec(
            num_scalar_prefetch=0,
            grid=grid,
            in_specs=[
                pl.BlockSpec((tm, D), lambda i, j: (i, 0)),   # x rows
                pl.BlockSpec((tn, D), lambda i, j: (j, 0)),   # weight rows
                pl.BlockSpec((1, tn), lambda i, j: (0, j)),   # bias slice
            ],
            out_specs=pl.BlockSpec((tm, tn), lambda i, j: (i, j)),
        ),
        compiler_params=pltpu.CompilerParams(
            dimension_semantics=("parallel", "parallel"),
        ),
        cost_estimate=cost,
    )(x, w, b)


def linear_postprocessor(samples, targets, w, b, class_mapping=None,
                         compute_dtype=jnp.bfloat16):
    """JAX equivalent of LinearPostprocessor.forward.

    samples: (B, D) features
    targets: passed through unchanged
    w:       (C, D) nn.Linear weight
    b:       (C,)   nn.Linear bias
    class_mapping: optional int array of class indices
    """
    # Gather the selected classes on the (small, static) weight side BEFORE
    # the matmul: cuts MXU work and HBM weight traffic by C / C'.
    if class_mapping is not None:
        w = w[class_mapping]      # (C', D)
        b = b[class_mapping]      # (C',)

    x_c = samples.astype(compute_dtype)
    w_c = w.astype(compute_dtype)
    b_c = b[None, :].astype(jnp.float32)

    preds = linear_classifier_pallas(x_c, w_c, b_c)
    return {"preds": preds, "target": targets}


if __name__ == "__main__":
    key = jax.random.PRNGKey(0)
    k_x, k_w, k_b, k_t = jax.random.split(key, 4)

    B, D, C = 8, 32, 16  # batch, feature dim, num classes (small synthetic shapes)

    samples = jax.random.normal(k_x, (B, D), dtype=jnp.float32)
    targets = jax.random.randint(k_t, (B,), 0, C, dtype=jnp.int32)

    # Deterministic "nn.Linear(D, C)" parameters.
    w = jax.random.normal(k_w, (C, D), dtype=jnp.float32) * 0.02
    b = jax.random.normal(k_b, (C,), dtype=jnp.float32) * 0.01

    # Optional class remapping buffer (LongTensor in the torch module).
    class_mapping = jnp.array([3, 0, 7, 12], dtype=jnp.int32)

    out = linear_postprocessor(samples, targets, w, b, class_mapping)
    jax.block_until_ready(out["preds"])
    jax.block_until_ready(out["target"])

    # Correctness check against plain-JAX f32 reference (bf16-compute kernel,
    # f32 accumulation -> loose tolerance).
    ref = (samples @ w.T + b)[:, class_mapping]
    assert out["preds"].shape == (B, class_mapping.shape[0])
    assert jnp.allclose(out["preds"], ref, atol=1e-2, rtol=1e-2)
    assert jnp.array_equal(out["target"], targets)

    # Also exercise the no-mapping path.
    out_full = linear_postprocessor(samples, targets, w, b, None)
    jax.block_until_ready(out_full["preds"])
    ref_full = samples @ w.T + b
    assert out_full["preds"].shape == (B, C)
    assert jnp.allclose(out_full["preds"], ref_full, atol=1e-2, rtol=1e-2)

    print("KERNEL_OK")
</pallas_src>

<mosaic_0001>
module attributes {stable_mosaic.version = 11 : i64} {
  func.func @_linear_kernel(%arg0: i32, %arg1: i32, %arg2: memref<8x32xbf16, #tpu.memory_space<vmem>>, %arg3: memref<4x32xbf16, #tpu.memory_space<vmem>>, %arg4: memref<1x4xf32, #tpu.memory_space<vmem>>, %arg5: memref<8x4xf32, #tpu.memory_space<vmem>>) attributes {dimension_semantics = [#tpu.dimension_semantics<parallel>, #tpu.dimension_semantics<parallel>], iteration_bounds = array<i64: 1, 1>, scalar_prefetch = 0 : i64, scratch_operands = 0 : i64, tpu.core_type = #tpu.core_type<tc>, window_params = [{transform_indices = @transform_0, window_bounds = array<i64: 8, 32>}, {transform_indices = @transform_1, window_bounds = array<i64: 4, 32>}, {transform_indices = @transform_2, window_bounds = array<i64: 1, 4>}, {transform_indices = @transform_3, window_bounds = array<i64: 8, 4>}]} {
    %c0 = arith.constant 0 : index
    %c0_0 = arith.constant 0 : index
    %0 = vector.load %arg2[%c0, %c0_0] : memref<8x32xbf16, #tpu.memory_space<vmem>>, vector<8x32xbf16>
    %c0_1 = arith.constant 0 : index
    %c0_2 = arith.constant 0 : index
    %1 = vector.load %arg3[%c0_1, %c0_2] : memref<4x32xbf16, #tpu.memory_space<vmem>>, vector<4x32xbf16>
    %cst = arith.constant dense<0.000000e+00> : vector<8x4xf32>
    %2 = tpu.matmul %0, %1, %cst {dimension_numbers = #tpu.dot_dimension_numbers<[1], [1], [0], [0], [0, 0, 1, 0], [], []>} : vector<8x32xbf16>, vector<4x32xbf16>, vector<8x4xf32> -> vector<8x4xf32>
    %c0_3 = arith.constant 0 : index
    %c0_4 = arith.constant 0 : index
    %3 = vector.load %arg4[%c0_3, %c0_4] : memref<1x4xf32, #tpu.memory_space<vmem>>, vector<1x4xf32>
    %4 = vector.broadcast %3 : vector<1x4xf32> to vector<8x4xf32>
    %5 = arith.addf %2, %4 : vector<8x4xf32>
    %c0_5 = arith.constant 0 : index
    %c0_6 = arith.constant 0 : index
    %6 = vector.load %arg5[%c0_5, %c0_6] : memref<8x4xf32, #tpu.memory_space<vmem>>, vector<8x4xf32>
    tpu.vector_store %arg5[%c0_5, %c0_6], %5 {strides = array<i32>} : memref<8x4xf32, #tpu.memory_space<vmem>>, vector<8x4xf32>,
    return
  }
  func.func @transform_0(%arg0: i32, %arg1: i32) -> (i32, i32) {
    %c0_i32 = arith.constant 0 : i32
    %c0_i32_0 = arith.constant 0 : i32
    return %arg0, %c0_i32 : i32, i32
  }
  func.func @transform_1(%arg0: i32, %arg1: i32) -> (i32, i32) {
    %c0_i32 = arith.constant 0 : i32
    %c0_i32_0 = arith.constant 0 : i32
    return %arg1, %c0_i32 : i32, i32
  }
  func.func @transform_2(%arg0: i32, %arg1: i32) -> (i32, i32) {
    %c0_i32 = arith.constant 0 : i32
    %c0_i32_0 = arith.constant 0 : i32
    return %c0_i32, %arg1 : i32, i32
  }
  func.func @transform_3(%arg0: i32, %arg1: i32) -> (i32, i32) {
    %c0_i32 = arith.constant 0 : i32
    return %arg0, %arg1 : i32, i32
  }
}

</mosaic_0001>

<llo_original>
// kernel: tpu_custom_call.1
$region0: #{tpu_custom_call.1}
  #allocation0 [shape = 'u32[]', space=smem, size = 0x4, offset = 0x4, fixed_abs, tag = 'smem constant byte address 0x4 - core index']
  #allocation1 [shape = 'u32[144,128]{1,0:T(1,128)}', space=vmem, size = 0x12000, scoped, tag = 'internal scratch']
  %s0 = inlined_call_operand.hbm [shape: bf16[8,32], index: 0, kind: input, shape index: {}]
  %s1 = inlined_call_operand.vmem [shape: bf16[4,32], index: 1, kind: input, shape index: {}]
  %s2 = inlined_call_operand.vmem [shape: f32[1,4], index: 2, kind: input, shape index: {}]
  %s3 = inlined_call_operand.vmem [shape: f32[8,4], index: 3, kind: output, shape index: {}]
  %s4 = sld [smem:[#allocation0]]
  $region26: #{tpu_custom_call.1} parent=0
    _
  %s6 = ssub.s32 1, %s4
  %s7 = scalar_select 0, %s6, %s4
  $region1: #{tpu_custom_call.1} parent=0
    #allocation2 [shape = 'u8[2048]{0}', space=vmem, size = 0x800, scoped, tag = 'input window, operand 0, single buffered']
    #allocation3 [shape = 's32[1]{0}', space=sflag, size = 0x4, scoped, tag = 'scoped memory for tpu_custom_call.1']
    %8 = vsyncpa [#allocation3], 0
    // Predicated region
    $region2: #{tpu_custom_call.1} parent=1 // pred_check
      _
    $region3: #{tpu_custom_call.1} parent=1 // pred_check_branch
      %10 = sbr.rel (0) target = $region5
    $region4: #{tpu_custom_call.1} parent=1 // pred_region
      %s12 = ssub.s32 64, 64
      %13 = vsyncadd [#allocation3], %s12
      %s15 = sshll.u32 [#allocation2], 4
      %s16 = int_to_ptr.vmem [resolvable:$true] %s15
      %18 = dma.hbm_to_vmem [thread:$0]  %s0, 64, %s16, [#allocation3]
    $region5: #{tpu_custom_call.1} parent=1 // pred_fallthru
      _
    // Predicated region
    $region6: #{tpu_custom_call.1} parent=1 // pred_check
      _
    $region7: #{tpu_custom_call.1} parent=1 // pred_check_branch
      %20 = sbr.rel (0) target = $region9
    $region8: #{tpu_custom_call.1} parent=1 // pred_region
      _
    $region9: #{tpu_custom_call.1} parent=1 // pred_fallthru
      _
    // Predicated region
    $region10: #{tpu_custom_call.1} parent=1 // pred_check
      _
    $region11: #{tpu_custom_call.1} parent=1 // pred_check_branch
      %22 = sbr.rel (0) target = $region13
    $region12: #{tpu_custom_call.1} parent=1 // pred_region
      _
    $region13: #{tpu_custom_call.1} parent=1 // pred_fallthru
      _
    // Predicated region
    $region14: #{tpu_custom_call.1} parent=1 // pred_check
      _
    $region15: #{tpu_custom_call.1} parent=1 // pred_check_branch
      %24 = sbr.rel (0) target = $region17
    $region16: #{tpu_custom_call.1} parent=1 // pred_region
      %25 = dma.done [#allocation3], 64
    $region17: #{tpu_custom_call.1} parent=1 // pred_fallthru
      _
    %v27 = vld [vmem:[#allocation2] sm:$0xf]
    %v28 = vld [vmem:[%s1] sm:$0x3]
    %v29 = vld [vmem:[%s2] sm:$0x1]
    %v31 = vlaneseq
    %v32 = vshrl.u32 %v31, 7
    %v33 = vsub.s32 0, %v32
    %v34 = vrot.slane %v29, %v33
    %vm36 = vcmask 261120
    %v38 = vsel %vm36, %v27, 0
    %v41 = vsel %vm36, %v28, 0
    %43 = vmatprep.subr.bf16.mxu0 0
    %44 = vmatpush1.bf16.xpose.msra.mxu0 %v41
    %45 = vmatprep.subr.bf16.mxu0 0
    %46 = vmatpush1.bf16.xpose.msra.mxu0 0
    %47 = vmatprep.subr.bf16.mxu0 0
    %48 = vmatpush1.bf16.xpose.msra.mxu0 0
    %49 = vmatprep.subr.bf16.mxu0 0
    %50 = vmatpush1.bf16.xpose.msra.mxu0 0
    %51 = vmatprep.subr.bf16.mxu0 0
    %52 = vmatpush1.bf16.xpose.msra.mxu0 0
    %53 = vmatprep.subr.bf16.mxu0 0
    %54 = vmatpush1.bf16.xpose.msra.mxu0 0
    %55 = vmatprep.subr.bf16.mxu0 0
    %56 = vmatpush1.bf16.xpose.msra.mxu0 0
    %57 = vmatprep.subr.bf16.mxu0 0
    %58 = vmatpush1.bf16.xpose.msra.mxu0 0
    %59 = vmatprep.subr.bf16.mxu0 0
    %60 = vmatpush1.bf16.xpose.msra.mxu0 0
    %61 = vmatprep.subr.bf16.mxu0 0
    %62 = vmatpush1.bf16.xpose.msra.mxu0 0
    %63 = vmatprep.subr.bf16.mxu0 0
    %64 = vmatpush1.bf16.xpose.msra.mxu0 0
    %65 = vmatprep.subr.bf16.mxu0 0
    %66 = vmatpush1.bf16.xpose.msra.mxu0 0
    %67 = vmatprep.subr.bf16.mxu0 0
    %68 = vmatpush1.bf16.xpose.msra.mxu0 0
    %69 = vmatprep.subr.bf16.mxu0 0
    %70 = vmatpush1.bf16.xpose.msra.mxu0 0
    %71 = vmatprep.subr.bf16.mxu0 0
    %72 = vmatpush1.bf16.xpose.msra.mxu0 0
    %73 = vmatprep.subr.bf16.mxu0 0
    %74 = vmatpush1.bf16.xpose.msra.mxu0 0
    %75 = vmatprep.mubr.bf16.mxu0 0
    %76 = vmatmul.mubr.bf16.gmra.mrb[0].mxu0 %v38
    %v77 = vpop.f32.mrb[0].mxu0
    %v78 = vadd.f32 %v34, %v77
    %v79 = vpop.f32.mrb[0].mxu0
    %v80 = vpop.f32.mrb[0].mxu0
    %v81 = vpop.f32.mrb[0].mxu0
    %82 = vdwg.mxu0
    %vm83 = vcmask 31744
    %84 = vst.msk [vmem:[%s3] sm:$0xff] %vm83, %v78
    // Predicated region
    $region18: #{tpu_custom_call.1} parent=1 // pred_check
      _
    $region19: #{tpu_custom_call.1} parent=1 // pred_check_branch
      %86 = sbr.rel (0) target = $region21
    $region20: #{tpu_custom_call.1} parent=1 // pred_region
      _
    $region21: #{tpu_custom_call.1} parent=1 // pred_fallthru
      _
    // Predicated region
    $region22: #{tpu_custom_call.1} parent=1 // pred_check
      _
    $region23: #{tpu_custom_call.1} parent=1 // pred_check_branch
      %88 = sbr.rel (0) target = $region25
    $region24: #{tpu_custom_call.1} parent=1 // pred_region
      _
    $region25: #{tpu_custom_call.1} parent=1 // pred_fallthru
      _
    %89 = vsyncpa [#allocation3], 1

</llo_original>
